<compile_context>
chip_gen: v7x
topology: tpu7x:2x2x1
jax: 0.10.0
libtpu: 0.0.40
codegen_flags: <defaults>
</compile_context>

<pallas_src>
import numpy as np
import jax
import jax.numpy as jnp
from jax.experimental import pallas as pl
from jax.experimental.pallas import tpu as pltpu


# ------------------------------------------------------------------------------
# Hardware-aware sizing
# ------------------------------------------------------------------------------
def _round_up(x, m):
    return ((x + m - 1) // m) * m


def _vmem_budget():
    """(vmem_limit_bytes, tile_budget_bytes), generation-aware (v7x has 64 MiB VMEM)."""
    try:
        cap = int(pltpu.get_tpu_info().vmem_capacity_bytes)
    except Exception:
        cap = 64 * 1024 * 1024            # conservative default (v7x-sized VMEM)
    cap = max(cap, 16 * 1024 * 1024)
    limit = min(cap // 2, 64 * 1024 * 1024)   # 64 MiB on v5e/v6e, 32 MiB on v7x
    tile_budget = cap // 8                    # budget for the pipelined state tiles
    return limit, tile_budget


_VMEM_LIMIT, _TILE_BUDGET = _vmem_budget()
_TR_CAP = 32768      # lanes; beyond this the DMA pipeline is already at roofline


def _pick_tile(R, D):
    """Lane tile for the rest axis: as large as the VMEM budget allows for the
    double-buffered (sr, si, or, oi) tiles, multiple of 128; when a single block
    would cover everything and R is big enough, split into >=2 blocks so both
    v7x TensorCores get work (harmless on single-TC v5e/v6e)."""
    per_lane = 4 * 2 * D * 4                       # 4 arrays x 2 buffers x D rows x f32
    tr = max(128, min(_TILE_BUDGET // per_lane, _TR_CAP))
    tr = (tr // 128) * 128
    if R <= tr:
        if R >= 256:
            tr = _round_up(-(-R // 2), 128)        # >= 2 grid steps
        else:
            tr = R                                 # full-extent block (allowed)
    return tr


# ------------------------------------------------------------------------------
# Kernels
# ------------------------------------------------------------------------------
def _make_gate_kernel(D):
    # Small gates (D <= 16, e.g. 1-2 qutrits): an MXU matmul is pure push/drain
    # latency, so unroll the contraction as VPU broadcast MACs instead.
    use_vpu = D <= 16

    def kernel(mr_ref, mi_ref, sr_ref, si_ref, or_ref, oi_ref):
        t = sr_ref.shape[-1]
        sr = sr_ref[...].reshape(D, t)             # drop leading size-1 dims (free)
        si = si_ref[...].reshape(D, t)
        mr = mr_ref[...]
        mi = mi_ref[...]
        if use_vpu:
            o_r = mr[:, 0:1] * sr[0:1, :] - mi[:, 0:1] * si[0:1, :]
            o_i = mi[:, 0:1] * sr[0:1, :] + mr[:, 0:1] * si[0:1, :]
            for c in range(1, D):                  # static, fully unrolled
                o_r = o_r + mr[:, c:c + 1] * sr[c:c + 1, :] - mi[:, c:c + 1] * si[c:c + 1, :]
                o_i = o_i + mi[:, c:c + 1] * sr[c:c + 1, :] + mr[:, c:c + 1] * si[c:c + 1, :]
        else:
            # Or = Mr.Sr - Mi.Si ; Oi = Mi.Sr + Mr.Si  (four MXU dots, f32 accum).
            o_r = (jnp.dot(mr, sr, preferred_element_type=jnp.float32)
                   - jnp.dot(mi, si, preferred_element_type=jnp.float32))
            o_i = (jnp.dot(mi, sr, preferred_element_type=jnp.float32)
                   + jnp.dot(mr, si, preferred_element_type=jnp.float32))
        or_ref[...] = o_r.reshape(or_ref.shape)
        oi_ref[...] = o_i.reshape(oi_ref.shape)

    return kernel


def _pallas_apply(mr, mi, sr, si, pre_dims, alias):
    """Apply the (D, D) complex gate to the second-to-last axis of the viewed state.

    sr / si have shape (*pre_extents, D, R).  `pre_dims` entries are
    ('ctrl', extent, value) or ('free', extent, None): ctrl dims are pinned to
    `value` in the index_map (only those blocks are touched), free dims become
    grid axes.  With alias=True the state is aliased in/out so all untouched
    (non-control) blocks pass through with zero extra HBM traffic.
    """
    D = mr.shape[0]
    R = sr.shape[-1]
    tr = _pick_tile(R, D)
    r_blocks = pl.cdiv(R, tr)
    free_extents = [e for kind, e, _ in pre_dims if kind == "free"]
    grid = tuple(free_extents) + (r_blocks,)

    def state_index_map(*g):
        idx, fi = [], 0
        for kind, _, val in pre_dims:
            if kind == "ctrl":
                idx.append(val)        # pinned control digit
            else:
                idx.append(g[fi])
                fi += 1
        idx.append(0)                  # gate axis: full block
        idx.append(g[-1])              # rest-axis tile
        return tuple(idx)

    block_shape = (1,) * len(pre_dims) + (D, tr)
    state_spec = pl.BlockSpec(block_shape, state_index_map)
    gate_spec = pl.BlockSpec((D, D), lambda *g: (0, 0))    # resident in VMEM

    cols = R * int(np.prod(free_extents, dtype=np.int64)) if free_extents else R
    cost = pl.CostEstimate(
        flops=int(8 * D * D * cols),
        transcendentals=0,
        bytes_accessed=int(16 * D * cols + 8 * D * D),
    )

    out_re, out_im = pl.pallas_call(
        _make_gate_kernel(D),
        out_shape=(jax.ShapeDtypeStruct(sr.shape, jnp.float32),
                   jax.ShapeDtypeStruct(si.shape, jnp.float32)),
        grid=grid,
        in_specs=[gate_spec, gate_spec, state_spec, state_spec],
        out_specs=(state_spec, state_spec),
        input_output_aliases=({2: 0, 3: 1} if alias else {}),
        compiler_params=pltpu.CompilerParams(
            dimension_semantics=("parallel",) * len(grid),
            vmem_limit_bytes=_VMEM_LIMIT,
        ),
        cost_estimate=cost,
    )(mr, mi, sr, si)
    return out_re, out_im


# ------------------------------------------------------------------------------
# Gate application (state evolution)
# ------------------------------------------------------------------------------
def _sort_gate_factors(mr, mi, obj, dim):
    """Reorder the tensor factors of the (tiny) gate so the target axes are in
    ascending order; permuting the gate is gate-sized, not state-sized."""
    k = len(obj)
    order = sorted(range(k), key=lambda j: obj[j])
    sorted_obj = [obj[j] for j in order]
    if order == list(range(k)):
        return sorted_obj, mr, mi
    D = dim ** k
    perm = list(order) + [k + j for j in order]
    shp = (dim,) * (2 * k)
    mr = jnp.transpose(mr.reshape(shp), perm).reshape(D, D)
    mi = jnp.transpose(mi.reshape(shp), perm).reshape(D, D)
    return sorted_obj, mr, mi


def _apply_qudit_gate(mr, mi, qs_re, qs_im, obj, ctrl, ctrl_states, dim):
    """Apply the complex gate (mr + i*mi) to axes `obj` of the state, restricted to
    the subspace where axes `ctrl` equal `ctrl_states` (identity elsewhere)."""
    n = qs_re.ndim
    k = len(obj)
    D = dim ** k
    mr = jnp.asarray(mr, jnp.float32).reshape(D, D)
    mi = jnp.asarray(mi, jnp.float32).reshape(D, D)
    if qs_re.dtype != jnp.float32:
        qs_re = qs_re.astype(jnp.float32)
    if qs_im.dtype != jnp.float32:
        qs_im = qs_im.astype(jnp.float32)

    obj = list(obj)
    ctrl = list(ctrl)
    ctrl_states = list(ctrl_states)
    sorted_obj, mr, mi = _sort_gate_factors(mr, mi, obj, dim)
    o0, oL = sorted_obj[0], sorted_obj[-1]
    consecutive = sorted_obj == list(range(o0, o0 + k))
    r_trail = dim ** (n - oL - 1)
    ctrl_before = all(c < o0 for c in ctrl)

    # ---------------- direct path: no state transpose, no slice/scatter ----------
    if consecutive and ctrl_before and ((not ctrl and o0 == 0) or r_trail >= 128):
        ctrl_map = {int(a): int(s) for a, s in zip(ctrl, ctrl_states)}
        pre_dims, run = [], 0
        for ax in range(o0):
            if ax in ctrl_map:
                if run:
                    pre_dims.append(("free", dim ** run, None))
                    run = 0
                pre_dims.append(("ctrl", dim, ctrl_map[ax]))
            else:
                run += 1
        if run:
            pre_dims.append(("free", dim ** run, None))
        view = tuple(e for _, e, _ in pre_dims) + (D, r_trail)
        sr = qs_re.reshape(view)       # pure view: no data movement
        si = qs_im.reshape(view)
        out_re, out_im = _pallas_apply(mr, mi, sr, si, pre_dims, alias=bool(ctrl))
        return out_re.reshape(qs_re.shape), out_im.reshape(qs_im.shape)

    # ---------------- controlled fallback (non-fusable layout) -------------------
    if ctrl:
        # TODO(synk): fold trailing / interleaved control axes into the BlockSpec
        # index_map as well; for now slice + at[].set (extra 1/dim**n_ctrl passes).
        idx = [slice(None)] * n
        for ax, st in zip(ctrl, ctrl_states):
            idx[ax] = int(st)
        idx = tuple(idx)
        new_obj = [a - sum(1 for c in ctrl if c < a) for a in sorted_obj]
        sub_re, sub_im = _apply_qudit_gate(mr, mi, qs_re[idx], qs_im[idx],
                                           new_obj, [], [], dim)
        return qs_re.at[idx].set(sub_re), qs_im.at[idx].set(sub_im)

    # ---------------- transpose fallback (non-contiguous target axes) ------------
    # TODO(synk): express the strided multi-axis gather with one view dim per target
    # axis in the BlockSpec to avoid the two full-state transposes.
    rest = [a for a in range(n) if a not in sorted_obj]
    perm = sorted_obj + rest
    R = dim ** (n - k)
    sr = jnp.transpose(qs_re, perm).reshape(D, R)
    si = jnp.transpose(qs_im, perm).reshape(D, R)
    out_re, out_im = _pallas_apply(mr, mi, sr, si, [], alias=False)
    inv = tuple(int(a) for a in np.argsort(perm))
    out_re = jnp.transpose(out_re.reshape((dim,) * n), inv)
    out_im = jnp.transpose(out_im.reshape((dim,) * n), inv)
    return out_re, out_im


def evolution_complex(cmat, qs, target_indices, dim):
    """QudiTop-style helper: apply complex matrix `cmat=(re, im)` on `target_indices`."""
    mr, mi = cmat
    qs_re, qs_im = qs
    return _apply_qudit_gate(mr, mi, qs_re, qs_im, list(target_indices), [], [], dim)


def check_unitary(mat, atol=1e-6):
    mat = np.asarray(mat)
    return np.allclose(mat.conj().T @ mat, np.eye(mat.shape[0]), atol=atol)


def _is_standard_controlled(cr, ci, dim, n_ctrl, n_obj, flat_ctrl, atol=1e-6):
    """True iff the full matrix is identity on every control value except flat_ctrl."""
    Dc, Do = dim ** n_ctrl, dim ** n_obj
    c = (np.asarray(cr).reshape(Dc, Do, Dc, Do)
         + 1j * np.asarray(ci).reshape(Dc, Do, Dc, Do))
    eye = np.eye(Do)
    for a in range(Dc):
        for b in range(Dc):
            blk = c[a, :, b, :]
            if a != b:
                if not np.allclose(blk, 0.0, atol=atol):
                    return False
            elif a != flat_ctrl:
                if not np.allclose(blk, eye, atol=atol):
                    return False
    return True


# ------------------------------------------------------------------------------
# GateBase (JAX / Pallas port of QudiTop's forward semantics)
# ------------------------------------------------------------------------------
class GateBase:
    def __init__(self, dim=None, obj_qudits=None, ctrl_qudits=None,
                 ctrl_states=None, name='GateBase'):
        if not isinstance(name, str):
            raise TypeError(f'Excepted string for gate name, get {type(name)}')
        if dim is None:
            raise ValueError('`dim` must be an integer, got None.')
        if dim > 10:
            raise ValueError(f'The supported maximum dimension is 10, but got {dim}.')
        self.dim = dim
        self.name = name
        self.obj_qudits = obj_qudits
        self.ctrl_qudits = ctrl_qudits
        self.ctrl_states = ctrl_states
        if obj_qudits:
            self.on(obj_qudits, ctrl_qudits, ctrl_states)

    def on(self, obj_qudits, ctrl_qudits=None, ctrl_states=None):
        if isinstance(obj_qudits, int):
            obj_qudits = [obj_qudits]
        if isinstance(ctrl_qudits, int):
            ctrl_qudits = [ctrl_qudits]
        if isinstance(ctrl_states, int):
            ctrl_states = [ctrl_states] * len(ctrl_qudits)
        if ctrl_qudits is not None and ctrl_states is None:
            ctrl_states = [self.dim - 1] * len(ctrl_qudits)
        if ctrl_qudits is None:
            ctrl_qudits = []
            ctrl_states = []
        if obj_qudits is None:
            raise ValueError("The `obj_qudits` can't be None")
        if set(obj_qudits) & set(ctrl_qudits):
            raise ValueError(f'{self.name} obj_qudits {obj_qudits} and ctrl_qudits '
                             f'{ctrl_qudits} cannot be same')
        if len(set(obj_qudits)) != len(obj_qudits):
            raise ValueError(f'{self.name} gate obj_qudits {obj_qudits} cannot be repeated')
        if len(set(ctrl_qudits)) != len(ctrl_qudits):
            raise ValueError(f'{self.name} gate ctrl_qudits {ctrl_qudits} cannot be repeated')
        self.obj_qudits = obj_qudits
        self.ctrl_qudits = ctrl_qudits
        self.ctrl_states = ctrl_states
        return self

    def forward(self, qs):
        qs_re, qs_im = qs
        dim = self.dim
        cr, ci = self._cmatrix()
        n_t = len(self.ctrl_qudits) + len(self.obj_qudits)
        Dt = dim ** n_t
        cr = jnp.asarray(cr, jnp.float32).reshape(Dt, Dt)
        ci = jnp.asarray(ci, jnp.float32).reshape(Dt, Dt)

        if not self.ctrl_qudits:
            return _apply_qudit_gate(cr, ci, qs_re, qs_im,
                                     list(self.obj_qudits), [], [], dim)

        n_ctrl = len(self.ctrl_qudits)
        n_obj = len(self.obj_qudits)
        Do = dim ** n_obj
        flat_ctrl = 0
        for s in self.ctrl_states:
            flat_ctrl = flat_ctrl * dim + int(s)

        if _is_standard_controlled(cr, ci, dim, n_ctrl, n_obj, flat_ctrl):
            # Block-diagonal controlled gate: apply only the obj block on the
            # control-matching subspace (identity elsewhere).
            blk = slice(flat_ctrl * Do, (flat_ctrl + 1) * Do)
            return _apply_qudit_gate(cr[blk, blk], ci[blk, blk], qs_re, qs_im,
                                     list(self.obj_qudits), list(self.ctrl_qudits),
                                     list(self.ctrl_states), dim)

        # General matrix that is not a standard controlled gate: apply the full
        # matrix on ctrl+obj axes (exactly the reference forward semantics).
        targets = list(self.ctrl_qudits) + list(self.obj_qudits)
        return _apply_qudit_gate(cr, ci, qs_re, qs_im, targets, [], [], dim)

    __call__ = forward

    def _cmatrix(self):
        return NotImplemented

    def matrix(self):
        cmat = self._cmatrix()
        return np.asarray(cmat[0]) + 1j * np.asarray(cmat[1])

    def is_unitary(self):
        return check_unitary(self.matrix())


class ShiftClockGate(GateBase):
    """Deterministic concrete gate: controlled product of shift/clock powers.
    The j-th obj qudit gets (X@Z)^(j+1), so factors are distinguishable (exercises
    the target-axis sorting of the gate tensor)."""

    def __init__(self, dim, obj_qudits, ctrl_qudits=None, ctrl_states=None):
        super().__init__(dim, obj_qudits, ctrl_qudits, ctrl_states, name='ShiftClock')

    def _cmatrix(self):
        d = self.dim
        omega = np.exp(2j * np.pi / d)
        X = np.zeros((d, d), dtype=np.complex128)
        for k in range(d):
            X[(k + 1) % d, k] = 1.0
        Z = np.diag(omega ** np.arange(d))
        U1 = X @ Z

        Uobj = np.array([[1.0 + 0j]])
        for j, _ in enumerate(self.obj_qudits):
            Uobj = np.kron(Uobj, np.linalg.matrix_power(U1, j + 1))
        obj_dim = d ** len(self.obj_qudits)

        n_ctrl = len(self.ctrl_qudits)
        Dc = d ** n_ctrl
        flat_ctrl = 0
        for s in self.ctrl_states:
            flat_ctrl = flat_ctrl * d + int(s)

        C = np.zeros((Dc * obj_dim, Dc * obj_dim), dtype=np.complex128)
        for c in range(Dc):
            block = Uobj if c == flat_ctrl else np.eye(obj_dim, dtype=np.complex128)
            C[c * obj_dim:(c + 1) * obj_dim, c * obj_dim:(c + 1) * obj_dim] = block
        return (jnp.asarray(C.real, jnp.float32), jnp.asarray(C.imag, jnp.float32))


# ------------------------------------------------------------------------------
# main: deterministic correctness checks against a pure-numpy reference
# ------------------------------------------------------------------------------
def _reference_apply(gate, psi, dim, n_qudits):
    C = np.asarray(gate.matrix())
    targets = list(gate.ctrl_qudits) + list(gate.obj_qudits)
    rest = [a for a in range(n_qudits) if a not in targets]
    perm = targets + rest
    inv_perm = list(np.argsort(perm))
    psi_p = np.transpose(psi, perm).reshape(dim ** len(targets), -1)
    ref = (C @ psi_p).reshape((dim,) * n_qudits)
    return np.transpose(ref, inv_perm)


def _make_state(n_qudits, dim, seed):
    key = jax.random.PRNGKey(seed)
    kre, kim = jax.random.split(key)
    shape = (dim,) * n_qudits
    re = jax.random.normal(kre, shape, dtype=jnp.float32)
    im = jax.random.normal(kim, shape, dtype=jnp.float32)
    norm = jnp.sqrt(jnp.sum(re ** 2 + im ** 2))
    return re / norm, im / norm


def _check(gate, qs, dim, n, label):
    psi = np.asarray(qs[0]) + 1j * np.asarray(qs[1])     # snapshot before the gate
    out_re, out_im = gate(qs)
    out_re = jax.block_until_ready(out_re)
    out_im = jax.block_until_ready(out_im)
    ref = _reference_apply(gate, psi, dim, n)
    assert np.allclose(np.asarray(out_re), ref.real, atol=1e-5, rtol=1e-5), label
    assert np.allclose(np.asarray(out_im), ref.imag, atol=1e-5, rtol=1e-5), label


if __name__ == "__main__":
    dim = 3

    # ---- 6-qutrit register (729 amplitudes): fallback paths ----------------------
    nA = 6
    qsA = _make_state(nA, dim, 0)
    # controlled, trailing rest too small to fuse -> block-diagonal slice fallback
    _check(ShiftClockGate(dim, obj_qudits=[2], ctrl_qudits=[0], ctrl_states=[2]),
           qsA, dim, nA, "ctrl-fallback")
    # non-contiguous, unsorted targets -> transpose fallback (gate factors permuted)
    _check(ShiftClockGate(dim, obj_qudits=[3, 1]), qsA, dim, nA, "transpose-path")
    # leading contiguous targets -> direct (D, R) path, VPU kernel (D = 9)
    _check(ShiftClockGate(dim, obj_qudits=[0, 1]), qsA, dim, nA, "leading-direct")

    # ---- 8-qutrit register (6561 amplitudes): direct / fused paths ---------------
    nB = 8
    qsB = _make_state(nB, dim, 1)
    # interior contiguous targets -> no-transpose direct path, 2-D grid
    _check(ShiftClockGate(dim, obj_qudits=[1, 2]), qsB, dim, nB, "interior-direct")
    # three contiguous targets -> MXU kernel path (D = 27 > 16)
    _check(ShiftClockGate(dim, obj_qudits=[0, 1, 2]), qsB, dim, nB, "mxu-direct")
    # controlled with leading control -> fused aliased path (control in index_map),
    # run last since it exercises input_output_aliases
    _check(ShiftClockGate(dim, obj_qudits=[2], ctrl_qudits=[0], ctrl_states=[1]),
           qsB, dim, nB, "ctrl-fused")

    print("KERNEL_OK")
</pallas_src>

<mosaic_0001>
module attributes {stable_mosaic.version = 11 : i64} {
  func.func @kernel(%arg0: i32, %arg1: memref<3x3xf32, #tpu.memory_space<vmem>>, %arg2: memref<3x3xf32, #tpu.memory_space<vmem>>, %arg3: memref<3x81xf32, #tpu.memory_space<vmem>>, %arg4: memref<3x81xf32, #tpu.memory_space<vmem>>, %arg5: memref<3x81xf32, #tpu.memory_space<vmem>>, %arg6: memref<3x81xf32, #tpu.memory_space<vmem>>) attributes {dimension_semantics = [#tpu.dimension_semantics<parallel>], iteration_bounds = array<i64: 1>, scalar_prefetch = 0 : i64, scratch_operands = 0 : i64, tpu.core_type = #tpu.core_type<tc>, window_params = [{pipeline_mode = #tpu.pipeline_mode<synchronous>, transform_indices = @transform_0, window_bounds = array<i64: 3, 3>}, {pipeline_mode = #tpu.pipeline_mode<synchronous>, transform_indices = @transform_1, window_bounds = array<i64: 3, 3>}, {transform_indices = @transform_2, window_bounds = array<i64: 3, 81>}, {transform_indices = @transform_3, window_bounds = array<i64: 3, 81>}, {transform_indices = @transform_4, window_bounds = array<i64: 3, 81>}, {transform_indices = @transform_5, window_bounds = array<i64: 3, 81>}]} {
    %c0 = arith.constant 0 : index
    %c0_0 = arith.constant 0 : index
    %0 = vector.load %arg3[%c0, %c0_0] : memref<3x81xf32, #tpu.memory_space<vmem>>, vector<3x81xf32>
    %c0_1 = arith.constant 0 : index
    %c0_2 = arith.constant 0 : index
    %1 = vector.load %arg4[%c0_1, %c0_2] : memref<3x81xf32, #tpu.memory_space<vmem>>, vector<3x81xf32>
    %c0_3 = arith.constant 0 : index
    %c0_4 = arith.constant 0 : index
    %2 = vector.load %arg1[%c0_3, %c0_4] : memref<3x3xf32, #tpu.memory_space<vmem>>, vector<3x3xf32>
    %c0_5 = arith.constant 0 : index
    %c0_6 = arith.constant 0 : index
    %3 = vector.load %arg2[%c0_5, %c0_6] : memref<3x3xf32, #tpu.memory_space<vmem>>, vector<3x3xf32>
    %4 = vector.extract_strided_slice %2 {offsets = [0, 0], sizes = [3, 1], strides = [1, 1]} : vector<3x3xf32> to vector<3x1xf32>
    %5 = vector.extract_strided_slice %0 {offsets = [0, 0], sizes = [1, 81], strides = [1, 1]} : vector<3x81xf32> to vector<1x81xf32>
    %6 = vector.broadcast %4 : vector<3x1xf32> to vector<3x81xf32>
    %7 = vector.broadcast %5 : vector<1x81xf32> to vector<3x81xf32>
    %8 = arith.mulf %6, %7 : vector<3x81xf32>
    %9 = vector.extract_strided_slice %3 {offsets = [0, 0], sizes = [3, 1], strides = [1, 1]} : vector<3x3xf32> to vector<3x1xf32>
    %10 = vector.extract_strided_slice %1 {offsets = [0, 0], sizes = [1, 81], strides = [1, 1]} : vector<3x81xf32> to vector<1x81xf32>
    %11 = vector.broadcast %9 : vector<3x1xf32> to vector<3x81xf32>
    %12 = vector.broadcast %10 : vector<1x81xf32> to vector<3x81xf32>
    %13 = arith.mulf %11, %12 : vector<3x81xf32>
    %14 = arith.subf %8, %13 : vector<3x81xf32>
    %15 = vector.extract_strided_slice %3 {offsets = [0, 0], sizes = [3, 1], strides = [1, 1]} : vector<3x3xf32> to vector<3x1xf32>
    %16 = vector.extract_strided_slice %0 {offsets = [0, 0], sizes = [1, 81], strides = [1, 1]} : vector<3x81xf32> to vector<1x81xf32>
    %17 = vector.broadcast %15 : vector<3x1xf32> to vector<3x81xf32>
    %18 = vector.broadcast %16 : vector<1x81xf32> to vector<3x81xf32>
    %19 = arith.mulf %17, %18 : vector<3x81xf32>
    %20 = vector.extract_strided_slice %2 {offsets = [0, 0], sizes = [3, 1], strides = [1, 1]} : vector<3x3xf32> to vector<3x1xf32>
    %21 = vector.extract_strided_slice %1 {offsets = [0, 0], sizes = [1, 81], strides = [1, 1]} : vector<3x81xf32> to vector<1x81xf32>
    %22 = vector.broadcast %20 : vector<3x1xf32> to vector<3x81xf32>
    %23 = vector.broadcast %21 : vector<1x81xf32> to vector<3x81xf32>
    %24 = arith.mulf %22, %23 : vector<3x81xf32>
    %25 = arith.addf %19, %24 : vector<3x81xf32>
    %26 = vector.extract_strided_slice %2 {offsets = [0, 1], sizes = [3, 1], strides = [1, 1]} : vector<3x3xf32> to vector<3x1xf32>
    %27 = vector.extract_strided_slice %0 {offsets = [1, 0], sizes = [1, 81], strides = [1, 1]} : vector<3x81xf32> to vector<1x81xf32>
    %28 = vector.broadcast %26 : vector<3x1xf32> to vector<3x81xf32>
    %29 = vector.broadcast %27 : vector<1x81xf32> to vector<3x81xf32>
    %30 = arith.mulf %28, %29 : vector<3x81xf32>
    %31 = arith.addf %14, %30 : vector<3x81xf32>
    %32 = vector.extract_strided_slice %3 {offsets = [0, 1], sizes = [3, 1], strides = [1, 1]} : vector<3x3xf32> to vector<3x1xf32>
    %33 = vector.extract_strided_slice %1 {offsets = [1, 0], sizes = [1, 81], strides = [1, 1]} : vector<3x81xf32> to vector<1x81xf32>
    %34 = vector.broadcast %32 : vector<3x1xf32> to vector<3x81xf32>
    %35 = vector.broadcast %33 : vector<1x81xf32> to vector<3x81xf32>
    %36 = arith.mulf %34, %35 : vector<3x81xf32>
    %37 = arith.subf %31, %36 : vector<3x81xf32>
    %38 = vector.extract_strided_slice %3 {offsets = [0, 1], sizes = [3, 1], strides = [1, 1]} : vector<3x3xf32> to vector<3x1xf32>
    %39 = vector.extract_strided_slice %0 {offsets = [1, 0], sizes = [1, 81], strides = [1, 1]} : vector<3x81xf32> to vector<1x81xf32>
    %40 = vector.broadcast %38 : vector<3x1xf32> to vector<3x81xf32>
    %41 = vector.broadcast %39 : vector<1x81xf32> to vector<3x81xf32>
    %42 = arith.mulf %40, %41 : vector<3x81xf32>
    %43 = arith.addf %25, %42 : vector<3x81xf32>
    %44 = vector.extract_strided_slice %2 {offsets = [0, 1], sizes = [3, 1], strides = [1, 1]} : vector<3x3xf32> to vector<3x1xf32>
    %45 = vector.extract_strided_slice %1 {offsets = [1, 0], sizes = [1, 81], strides = [1, 1]} : vector<3x81xf32> to vector<1x81xf32>
    %46 = vector.broadcast %44 : vector<3x1xf32> to vector<3x81xf32>
    %47 = vector.broadcast %45 : vector<1x81xf32> to vector<3x81xf32>
    %48 = arith.mulf %46, %47 : vector<3x81xf32>
    %49 = arith.addf %43, %48 : vector<3x81xf32>
    %50 = vector.extract_strided_slice %2 {offsets = [0, 2], sizes = [3, 1], strides = [1, 1]} : vector<3x3xf32> to vector<3x1xf32>
    %51 = vector.extract_strided_slice %0 {offsets = [2, 0], sizes = [1, 81], strides = [1, 1]} : vector<3x81xf32> to vector<1x81xf32>
    %52 = vector.broadcast %50 : vector<3x1xf32> to vector<3x81xf32>
    %53 = vector.broadcast %51 : vector<1x81xf32> to vector<3x81xf32>
    %54 = arith.mulf %52, %53 : vector<3x81xf32>
    %55 = arith.addf %37, %54 : vector<3x81xf32>
    %56 = vector.extract_strided_slice %3 {offsets = [0, 2], sizes = [3, 1], strides = [1, 1]} : vector<3x3xf32> to vector<3x1xf32>
    %57 = vector.extract_strided_slice %1 {offsets = [2, 0], sizes = [1, 81], strides = [1, 1]} : vector<3x81xf32> to vector<1x81xf32>
    %58 = vector.broadcast %56 : vector<3x1xf32> to vector<3x81xf32>
    %59 = vector.broadcast %57 : vector<1x81xf32> to vector<3x81xf32>
    %60 = arith.mulf %58, %59 : vector<3x81xf32>
    %61 = arith.subf %55, %60 : vector<3x81xf32>
    %62 = vector.extract_strided_slice %3 {offsets = [0, 2], sizes = [3, 1], strides = [1, 1]} : vector<3x3xf32> to vector<3x1xf32>
    %63 = vector.extract_strided_slice %0 {offsets = [2, 0], sizes = [1, 81], strides = [1, 1]} : vector<3x81xf32> to vector<1x81xf32>
    %64 = vector.broadcast %62 : vector<3x1xf32> to vector<3x81xf32>
    %65 = vector.broadcast %63 : vector<1x81xf32> to vector<3x81xf32>
    %66 = arith.mulf %64, %65 : vector<3x81xf32>
    %67 = arith.addf %49, %66 : vector<3x81xf32>
    %68 = vector.extract_strided_slice %2 {offsets = [0, 2], sizes = [3, 1], strides = [1, 1]} : vector<3x3xf32> to vector<3x1xf32>
    %69 = vector.extract_strided_slice %1 {offsets = [2, 0], sizes = [1, 81], strides = [1, 1]} : vector<3x81xf32> to vector<1x81xf32>
    %70 = vector.broadcast %68 : vector<3x1xf32> to vector<3x81xf32>
    %71 = vector.broadcast %69 : vector<1x81xf32> to vector<3x81xf32>
    %72 = arith.mulf %70, %71 : vector<3x81xf32>
    %73 = arith.addf %67, %72 : vector<3x81xf32>
    %c0_7 = arith.constant 0 : index
    %c0_8 = arith.constant 0 : index
    %74 = vector.load %arg5[%c0_7, %c0_8] : memref<3x81xf32, #tpu.memory_space<vmem>>, vector<3x81xf32>
    tpu.vector_store %arg5[%c0_7, %c0_8], %61 {strides = array<i32>} : memref<3x81xf32, #tpu.memory_space<vmem>>, vector<3x81xf32>,
    %c0_9 = arith.constant 0 : index
    %c0_10 = arith.constant 0 : index
    %75 = vector.load %arg6[%c0_9, %c0_10] : memref<3x81xf32, #tpu.memory_space<vmem>>, vector<3x81xf32>
    tpu.vector_store %arg6[%c0_9, %c0_10], %73 {strides = array<i32>} : memref<3x81xf32, #tpu.memory_space<vmem>>, vector<3x81xf32>,
    return
  }
  func.func @transform_0(%arg0: i32) -> (i32, i32) {
    %c0_i32 = arith.constant 0 : i32
    %c0_i32_0 = arith.constant 0 : i32
    %c0_i32_1 = arith.constant 0 : i32
    return %c0_i32, %c0_i32_0 : i32, i32
  }
  func.func @transform_1(%arg0: i32) -> (i32, i32) {
    %c0_i32 = arith.constant 0 : i32
    %c0_i32_0 = arith.constant 0 : i32
    %c0_i32_1 = arith.constant 0 : i32
    return %c0_i32, %c0_i32_0 : i32, i32
  }
  func.func @transform_2(%arg0: i32) -> (i32, i32) {
    %c0_i32 = arith.constant 0 : i32
    %c0_i32_0 = arith.constant 0 : i32
    return %c0_i32, %arg0 : i32, i32
  }
  func.func @transform_3(%arg0: i32) -> (i32, i32) {
    %c0_i32 = arith.constant 0 : i32
    %c0_i32_0 = arith.constant 0 : i32
    return %c0_i32, %arg0 : i32, i32
  }
  func.func @transform_4(%arg0: i32) -> (i32, i32) {
    %c0_i32 = arith.constant 0 : i32
    %c0_i32_0 = arith.constant 0 : i32
    return %c0_i32, %arg0 : i32, i32
  }
  func.func @transform_5(%arg0: i32) -> (i32, i32) {
    %c0_i32 = arith.constant 0 : i32
    %c0_i32_0 = arith.constant 0 : i32
    return %c0_i32, %arg0 : i32, i32
  }
}

</mosaic_0001>

<llo_original>
// kernel: tpu_custom_call.1
$region0: #{tpu_custom_call.1}
  #allocation0 [shape = 'u32[]', space=smem, size = 0x4, offset = 0x4, fixed_abs, tag = 'smem constant byte address 0x4 - core index']
  #allocation1 [shape = 'u32[144,128]{1,0:T(1,128)}', space=vmem, size = 0x12000, scoped, tag = 'internal scratch']
  %s0 = inlined_call_operand.hbm [shape: f32[3,3], index: 0, kind: input, shape index: {}]
  %s1 = inlined_call_operand.hbm [shape: f32[3,3], index: 1, kind: input, shape index: {}]
  %s2 = inlined_call_operand.vmem [shape: f32[3,81], index: 2, kind: input, shape index: {}]
  %s3 = inlined_call_operand.vmem [shape: f32[3,81], index: 3, kind: input, shape index: {}]
  %s4 = inlined_call_operand.hbm [shape: f32[3,81], index: 4, kind: output, shape index: {0}]
  %s5 = inlined_call_operand.hbm [shape: f32[3,81], index: 5, kind: output, shape index: {1}]
  %6 = xla_tuple %s4, %s5
  %s7 = sld [smem:[#allocation0]]
  $region42: #{tpu_custom_call.1} parent=0
    _
  %s9 = ssub.s32 1, %s7
  %s10 = scalar_select 0, %s9, %s7
  $region1: #{tpu_custom_call.1} parent=0
    #allocation2 [shape = 'u8[2048]{0}', space=vmem, size = 0x800, scoped, tag = 'input window, operand 0, single buffered']
    #allocation3 [shape = 's32[1]{0}', space=sflag, size = 0x4, scoped, tag = 'scoped memory for tpu_custom_call.1']
    #allocation4 [shape = 's32[1]{0}', space=sflag, size = 0x4, scoped, tag = 'scoped memory for tpu_custom_call.1']
    #allocation5 [shape = 'u8[2048]{0}', space=vmem, size = 0x800, scoped, tag = 'input window, operand 1, single buffered']
    #allocation6 [shape = 's32[1]{0}', space=sflag, size = 0x4, scoped, tag = 'scoped memory for tpu_custom_call.1']
    #allocation7 [shape = 'u8[2048]{0}', space=vmem, size = 0x800, scoped, tag = 'output window, operand 0, single buffered']
    #allocation8 [shape = 'u8[2048]{0}', space=vmem, size = 0x800, scoped, tag = 'output window, operand 1, single buffered']
    #allocation9 [shape = 's32[1]{0}', space=sflag, size = 0x4, scoped, tag = 'scoped memory for tpu_custom_call.1']
    %11 = vsyncpa [#allocation3], 0
    %12 = vsyncpa [#allocation6], 0
    %13 = vsyncpa [#allocation4], 0
    %14 = vsyncpa [#allocation9], 0
    // Predicated region
    $region2: #{tpu_custom_call.1} parent=1 // pred_check
      _
    $region3: #{tpu_custom_call.1} parent=1 // pred_check_branch
      %16 = sbr.rel (0) target = $region5
    $region4: #{tpu_custom_call.1} parent=1 // pred_region
      %s18 = ssub.s32 64, 64
      %19 = vsyncadd [#allocation3], %s18
      %s21 = sshll.u32 [#allocation2], 4
      %s22 = int_to_ptr.vmem [resolvable:$true] %s21
      %24 = dma.hbm_to_vmem [thread:$0]  %s0, 64, %s22, [#allocation3]
    $region5: #{tpu_custom_call.1} parent=1 // pred_fallthru
      _
    // Predicated region
    $region6: #{tpu_custom_call.1} parent=1 // pred_check
      _
    $region7: #{tpu_custom_call.1} parent=1 // pred_check_branch
      %26 = sbr.rel (0) target = $region9
    $region8: #{tpu_custom_call.1} parent=1 // pred_region
      %s28 = ssub.s32 64, 64
      %29 = vsyncadd [#allocation6], %s28
      %s31 = sshll.u32 [#allocation5], 4
      %s32 = int_to_ptr.vmem [resolvable:$true] %s31
      %34 = dma.hbm_to_vmem [thread:$0]  %s1, 64, %s32, [#allocation6]
    $region9: #{tpu_custom_call.1} parent=1 // pred_fallthru
      _
    // Predicated region
    $region10: #{tpu_custom_call.1} parent=1 // pred_check
      _
    $region11: #{tpu_custom_call.1} parent=1 // pred_check_branch
      %36 = sbr.rel (0) target = $region13
    $region12: #{tpu_custom_call.1} parent=1 // pred_region
      _
    $region13: #{tpu_custom_call.1} parent=1 // pred_fallthru
      _
    // Predicated region
    $region14: #{tpu_custom_call.1} parent=1 // pred_check
      _
    $region15: #{tpu_custom_call.1} parent=1 // pred_check_branch
      %38 = sbr.rel (0) target = $region17
    $region16: #{tpu_custom_call.1} parent=1 // pred_region
      _
    $region17: #{tpu_custom_call.1} parent=1 // pred_fallthru
      _
    // Predicated region
    $region18: #{tpu_custom_call.1} parent=1 // pred_check
      _
    $region19: #{tpu_custom_call.1} parent=1 // pred_check_branch
      %40 = sbr.rel (0) target = $region21
    $region20: #{tpu_custom_call.1} parent=1 // pred_region
      %41 = dma.done [#allocation3], 64
    $region21: #{tpu_custom_call.1} parent=1 // pred_fallthru
      _
    // Predicated region
    $region22: #{tpu_custom_call.1} parent=1 // pred_check
      _
    $region23: #{tpu_custom_call.1} parent=1 // pred_check_branch
      %43 = sbr.rel (0) target = $region25
    $region24: #{tpu_custom_call.1} parent=1 // pred_region
      %44 = dma.done [#allocation6], 64
    $region25: #{tpu_custom_call.1} parent=1 // pred_fallthru
      _
    %v45 = vld [vmem:[%s2] sm:$0x7]
    %v46 = vld [vmem:[%s3] sm:$0x7]
    %v47 = vld [vmem:[#allocation2] sm:$0x7]
    %v48 = vld [vmem:[#allocation5] sm:$0x7]
    %50 = vset.pattern.permute.xlu0 0
    %51 = vperm.xlu0 %50, %v47
    %v52 = vpop.permute.xlu0 %51
    %v54 = vlaneseq
    %v55 = vshrl.u32 %v54, 7
    %v56 = vsub.s32 0, %v55
    %v57 = vrot.slane %v45, %v56
    %v58 = vmul.f32 %v52, %v57
    %60 = vset.pattern.permute.xlu0 0
    %61 = vperm.xlu0 %60, %v48
    %v62 = vpop.permute.xlu0 %61
    %v64 = vlaneseq
    %v65 = vshrl.u32 %v64, 7
    %v66 = vsub.s32 0, %v65
    %v67 = vrot.slane %v46, %v66
    %v68 = vmul.f32 %v62, %v67
    %v69 = vsub.f32 %v58, %v68
    %v70 = vmul.f32 %v62, %v57
    %v71 = vmul.f32 %v52, %v67
    %v72 = vadd.f32 %v70, %v71
    %73 = vset.pattern.permute.xlu0 1
    %74 = vperm.xlu0 %73, %v47
    %v75 = vpop.permute.xlu0 %74
    %v77 = vlaneseq
    %v78 = vshrl.u32 %v77, 7
    %v79 = vsub.s32 1, %v78
    %v80 = vrot.slane %v45, %v79
    %v81 = vmul.f32 %v75, %v80
    %v82 = vadd.f32 %v69, %v81
    %83 = vset.pattern.permute.xlu0 1
    %84 = vperm.xlu0 %83, %v48
    %v85 = vpop.permute.xlu0 %84
    %v87 = vlaneseq
    %v88 = vshrl.u32 %v87, 7
    %v89 = vsub.s32 1, %v88
    %v90 = vrot.slane %v46, %v89
    %v91 = vmul.f32 %v85, %v90
    %v92 = vsub.f32 %v82, %v91
    %v93 = vmul.f32 %v85, %v80
    %v94 = vadd.f32 %v72, %v93
    %v95 = vmul.f32 %v75, %v90
    %v96 = vadd.f32 %v94, %v95
    %97 = vset.pattern.permute.xlu0 2
    %98 = vperm.xlu0 %97, %v47
    %v99 = vpop.permute.xlu0 %98
    %v101 = vlaneseq
    %v102 = vshrl.u32 %v101, 7
    %v103 = vsub.s32 2, %v102
    %v104 = vrot.slane %v45, %v103
    %v105 = vmul.f32 %v99, %v104
    %v106 = vadd.f32 %v92, %v105
    %107 = vset.pattern.permute.xlu0 2
    %108 = vperm.xlu0 %107, %v48
    %v109 = vpop.permute.xlu0 %108
    %v111 = vlaneseq
    %v112 = vshrl.u32 %v111, 7
    %v113 = vsub.s32 2, %v112
    %v114 = vrot.slane %v46, %v113
    %v115 = vmul.f32 %v109, %v114
    %v116 = vsub.f32 %v106, %v115
    %v117 = vmul.f32 %v109, %v104
    %v118 = vadd.f32 %v96, %v117
    %v119 = vmul.f32 %v99, %v114
    %v120 = vadd.f32 %v118, %v119
    %vm121 = vcmask 657408
    %122 = vst.msk [vmem:[#allocation7] sm:$0x7] %vm121, %v116
    %123 = vst.msk [vmem:[#allocation8] sm:$0x7] %vm121, %v120
    // Predicated region
    $region26: #{tpu_custom_call.1} parent=1 // pred_check
      _
    $region27: #{tpu_custom_call.1} parent=1 // pred_check_branch
      %125 = sbr.rel (0) target = $region29
    $region28: #{tpu_custom_call.1} parent=1 // pred_region
      %s127 = ssub.s32 64, 64
      %128 = vsyncadd [#allocation4], %s127
      %s130 = sshll.u32 [#allocation7], 4
      %s131 = int_to_ptr.vmem [resolvable:$true] %s130
      %133 = dma.vmem_to_hbm [thread:$0]  %s131, 64, %s4, [#allocation4]
    $region29: #{tpu_custom_call.1} parent=1 // pred_fallthru
      _
    // Predicated region
    $region30: #{tpu_custom_call.1} parent=1 // pred_check
      _
    $region31: #{tpu_custom_call.1} parent=1 // pred_check_branch
      %135 = sbr.rel (0) target = $region33
    $region32: #{tpu_custom_call.1} parent=1 // pred_region
      %s137 = ssub.s32 64, 64
      %138 = vsyncadd [#allocation9], %s137
      %s140 = sshll.u32 [#allocation8], 4
      %s141 = int_to_ptr.vmem [resolvable:$true] %s140
      %143 = dma.vmem_to_hbm [thread:$0]  %s141, 64, %s5, [#allocation9]
    $region33: #{tpu_custom_call.1} parent=1 // pred_fallthru
      _
    // Predicated region
    $region34: #{tpu_custom_call.1} parent=1 // pred_check
      _
    $region35: #{tpu_custom_call.1} parent=1 // pred_check_branch
      %145 = sbr.rel (0) target = $region37
    $region36: #{tpu_custom_call.1} parent=1 // pred_region
      %146 = dma.done [#allocation4], 64
    $region37: #{tpu_custom_call.1} parent=1 // pred_fallthru
      _
    // Predicated region
    $region38: #{tpu_custom_call.1} parent=1 // pred_check
      _
    $region39: #{tpu_custom_call.1} parent=1 // pred_check_branch
      %148 = sbr.rel (0) target = $region41
    $region40: #{tpu_custom_call.1} parent=1 // pred_region
      %149 = dma.done [#allocation9], 64
    $region41: #{tpu_custom_call.1} parent=1 // pred_fallthru
      _
    %150 = vsyncpa [#allocation3], 1
    %151 = vsyncpa [#allocation6], 1
    %152 = vsyncpa [#allocation4], 1
    %153 = vsyncpa [#allocation9], 1

</llo_original>
